<compile_context>
chip_gen: v6e
topology: v6e:2x2x1
jax: 0.10.0
libtpu: 0.0.40
codegen_flags: <defaults>
</compile_context>

<pallas_src>
import jax
import jax.numpy as jnp
from jax import lax
from jax.experimental import pallas as pl
from jax.experimental.pallas import tpu as pltpu

_LANES = 128
_TARGET_BLOCK_BYTES = 2 << 20  # ~2 MiB input blocks


def _cdiv(a, b):
    return -(-a // b)


def _round_up(x, m):
    return _cdiv(x, m) * m


def _iou_partial_sums(pred3, target3, *, tile_r, n_outer, inner_tiles,
                      total_tiles, rows, mask_needed):
    """Returns per-(batch, outer-chunk) partial sums of t*p and t+p."""
    b = pred3.shape[0]
    itemsize = jnp.dtype(pred3.dtype).itemsize
    groups = tile_r // 8  # tile_r is always a multiple of 8

    def kernel(pred_ref, target_ref, iand_ref, isum_ref, iand_acc, isum_acc):
        k = pl.program_id(2)

        @pl.when(k == 0)
        def _init():
            iand_acc[...] = jnp.zeros_like(iand_acc)
            isum_acc[...] = jnp.zeros_like(isum_acc)

        p = pred_ref[0].astype(jnp.float32)     # (tile_r, 128)
        t = target_ref[0].astype(jnp.float32)   # (tile_r, 128)

        def accumulate(p_v, t_v):
            # VPU-only: elementwise + cross-vreg adds into (8,128) scratch.
            iand_acc[...] += (p_v * t_v).reshape(groups, 8, _LANES).sum(axis=0)
            isum_acc[...] += (p_v + t_v).reshape(groups, 8, _LANES).sum(axis=0)

        if mask_needed:
            o = pl.program_id(1)
            row0 = (o * inner_tiles + k) * tile_r
            in_bounds = row0 + tile_r <= rows

            @pl.when(in_bounds)
            def _full():
                accumulate(p, t)

            @pl.when(jnp.logical_not(in_bounds))
            def _partial():
                # Partial / duplicated tail tile: OOB block contents are
                # unspecified, so mask with a select (never multiply).
                rid = row0 + lax.broadcasted_iota(jnp.int32, (tile_r, _LANES), 0)
                valid = rid < rows
                accumulate(jnp.where(valid, p, 0.0), jnp.where(valid, t, 0.0))
        else:
            accumulate(p, t)

        @pl.when(k == pl.num_programs(2) - 1)
        def _finalize():
            iand_ref[0, 0] = iand_acc[...]
            isum_ref[0, 0] = isum_acc[...]

    def in_map(i, o, k):
        blk = o * inner_tiles + k
        if n_outer * inner_tiles > total_tiles:
            # Duplicated trailing steps re-read a valid block; the in-kernel
            # mask zeroes their contribution.
            blk = jnp.minimum(blk, total_tiles - 1)
        return (i, blk, 0)

    out_map = lambda i, o, k: (i, o, 0, 0)

    n_total = rows * _LANES
    tile_bytes = tile_r * _LANES * itemsize
    vmem_limit = int(max(16 << 20, 4 * tile_bytes + (6 << 20)))

    cost = pl.CostEstimate(
        flops=3 * b * n_total,
        transcendentals=0,
        bytes_accessed=2 * b * n_total * itemsize
        + 2 * b * n_outer * 8 * _LANES * 4,
    )

    return pl.pallas_call(
        kernel,
        out_shape=(
            jax.ShapeDtypeStruct((b, n_outer, 8, _LANES), jnp.float32),
            jax.ShapeDtypeStruct((b, n_outer, 8, _LANES), jnp.float32),
        ),
        grid_spec=pltpu.PrefetchScalarGridSpec(
            num_scalar_prefetch=0,
            grid=(b, n_outer, inner_tiles),
            in_specs=[
                pl.BlockSpec((1, tile_r, _LANES), in_map),
                pl.BlockSpec((1, tile_r, _LANES), in_map),
            ],
            out_specs=[
                pl.BlockSpec((1, 1, 8, _LANES), out_map),
                pl.BlockSpec((1, 1, 8, _LANES), out_map),
            ],
            scratch_shapes=[
                pltpu.VMEM((8, _LANES), jnp.float32),  # sum(t * p) partials
                pltpu.VMEM((8, _LANES), jnp.float32),  # sum(t + p) partials
            ],
        ),
        compiler_params=pltpu.CompilerParams(
            dimension_semantics=("parallel", "parallel", "arbitrary"),
            vmem_limit_bytes=vmem_limit,
        ),
        cost_estimate=cost,
    )(pred3, target3)


def iou_loss(pred, target, size_average=True, batch_average=True, *,
             target_block_bytes=_TARGET_BLOCK_BYTES):
    """Pallas equivalent of utils.IoU_Loss.IOU().forward(pred, target)."""
    assert pred.shape == target.shape
    b = pred.shape[0]
    n = 1
    for d in pred.shape[1:]:
        n *= d

    itemsize = jnp.dtype(pred.dtype).itemsize
    # Second-minor block alignment: 8 rows for 4-byte dtypes, 32 for packed
    # (bf16 / int8 / fp8) dtypes.
    row_align = 8 if itemsize >= 4 else 32
    granule = row_align * _LANES

    pred_flat = pred.reshape(b, n)
    target_flat = target.reshape(b, n)

    n_padded = _round_up(n, granule)
    if n_padded != n:
        # Rare fallback (C*H*W not a multiple of row_align*128); zeros are
        # reduction-neutral.  Granule-aligned image shapes skip this, so the
        # kernel is then the only HBM pass over the inputs.
        pad = n_padded - n
        pred_flat = jnp.pad(pred_flat, ((0, 0), (0, pad)))
        target_flat = jnp.pad(target_flat, ((0, 0), (0, pad)))
    rows = n_padded // _LANES

    pred3 = pred_flat.reshape(b, rows, _LANES)
    target3 = target_flat.reshape(b, rows, _LANES)

    # ---- row tile: ~target_block_bytes per input block, aligned ----
    cap_rows = max(row_align,
                   (target_block_bytes // (_LANES * itemsize)) // row_align * row_align)
    tile_r = min(cap_rows, rows)
    total_tiles = _cdiv(rows, tile_r)

    # ---- make sure both v7x TensorCores are fed when batch alone cannot ----
    n_outer = 1
    if b % 2 == 1:
        if total_tiles >= 2:
            n_outer = 2
        elif rows >= 2 * row_align:
            tile_r = _round_up(_cdiv(rows, 2), row_align)
            total_tiles = _cdiv(rows, tile_r)
            n_outer = 2
    inner_tiles = _cdiv(total_tiles, n_outer)
    mask_needed = n_outer * inner_tiles * tile_r > rows

    iand_part, isum_part = _iou_partial_sums(
        pred3, target3, tile_r=tile_r, n_outer=n_outer,
        inner_tiles=inner_tiles, total_tiles=total_tiles, rows=rows,
        mask_needed=mask_needed)

    iand = jnp.sum(iand_part, axis=(1, 2, 3))   # (b,)
    isum = jnp.sum(isum_part, axis=(1, 2, 3))   # (b,)
    ior = isum - iand
    # NOTE: matches the PyTorch reference exactly -- ior == 0 yields inf/nan.
    loss = jnp.sum(1.0 - iand / ior)
    if size_average:
        loss = loss / b
    elif batch_average:
        loss = loss / b
    return loss


def _iou_ref(pred, target, size_average=True, batch_average=True):
    # pure-JAX reference mirroring the PyTorch loop, for validation
    b = pred.shape[0]
    p = pred.astype(jnp.float32)
    t = target.astype(jnp.float32)
    axes = tuple(range(1, pred.ndim))
    iand = jnp.sum(t * p, axis=axes)
    ior = jnp.sum(t, axis=axes) + jnp.sum(p, axis=axes) - iand
    loss = jnp.sum(1.0 - iand / ior)
    if size_average:
        loss = loss / b
    elif batch_average:
        loss = loss / b
    return loss


if __name__ == "__main__":
    key = jax.random.PRNGKey(0)

    def make(k, shape, dtype=jnp.float32):
        k1, k2 = jax.random.split(k)
        pred = jax.nn.sigmoid(jax.random.normal(k1, shape)).astype(dtype)
        target = (jax.random.uniform(k2, shape) > 0.5).astype(dtype)
        return pred, target

    def check(pred, target, atol=1e-5, **kw):
        out = jax.block_until_ready(iou_loss(pred, target, **kw))
        ref = _iou_ref(pred, target)
        assert jnp.isfinite(ref), ref
        assert jnp.allclose(out, ref, atol=atol, rtol=1e-4), (out, ref)

    keys = jax.random.split(key, 6)

    # 1) granule-aligned f32 (no host-side pad, single tile per batch)
    check(*make(keys[0], (2, 4, 16, 16)))

    # 2) non-aligned C*H*W -> exercises the rare zero-pad fallback
    check(*make(keys[1], (2, 3, 10, 10)))

    # 3) B == 1 -> rows split into two parallel chunks (feeds both v7x TCs)
    check(*make(keys[2], (1, 4, 32, 32)))

    # 4) bf16 inputs (halved HBM traffic), f32 accumulation in-kernel
    check(*make(keys[3], (1, 3, 24, 24), dtype=jnp.bfloat16), atol=1e-3)

    # 5) forced small blocks -> partial last tile, in-kernel jnp.where mask
    check(*make(keys[4], (1, 3, 32, 32)), target_block_bytes=16 * 128 * 4)

    # 6) forced small blocks, odd tile count -> clamped duplicate tail tile
    check(*make(keys[5], (1, 3, 32, 32)), target_block_bytes=8 * 128 * 4)

    print("KERNEL_OK")
</pallas_src>

<mosaic_0001>
module attributes {stable_mosaic.version = 11 : i64} {
  func.func @kernel(%arg0: i32, %arg1: i32, %arg2: i32, %arg3: memref<1x8x128xf32, #tpu.memory_space<vmem>>, %arg4: memref<1x8x128xf32, #tpu.memory_space<vmem>>, %arg5: memref<1x1x8x128xf32, #tpu.memory_space<vmem>>, %arg6: memref<1x1x8x128xf32, #tpu.memory_space<vmem>>, %arg7: memref<8x128xf32, #tpu.memory_space<vmem>>, %arg8: memref<8x128xf32, #tpu.memory_space<vmem>>) attributes {dimension_semantics = [#tpu.dimension_semantics<parallel>, #tpu.dimension_semantics<parallel>, #tpu.dimension_semantics<arbitrary>], iteration_bounds = array<i64: 2, 1, 1>, scalar_prefetch = 0 : i64, scratch_operands = 2 : i64, tpu.core_type = #tpu.core_type<tc>, window_params = [{transform_indices = @transform_0, window_bounds = array<i64: 1, 8, 128>}, {transform_indices = @transform_1, window_bounds = array<i64: 1, 8, 128>}, {transform_indices = @transform_2, window_bounds = array<i64: 1, 1, 8, 128>}, {transform_indices = @transform_3, window_bounds = array<i64: 1, 1, 8, 128>}]} {
    %c0_i32 = arith.constant 0 : i32
    %0 = arith.cmpi eq, %arg2, %c0_i32 : i32
    %1 = arith.extui %0 : i1 to i32
    %c0_i32_0 = arith.constant 0 : i32
    %2 = arith.cmpi ne, %1, %c0_i32_0 : i32
    scf.if %2 {
      %cst_17 = arith.constant 0.000000e+00 : f32
      %22 = vector.broadcast %cst_17 : f32 to vector<8x128xf32>
      %c0_18 = arith.constant 0 : index
      %c0_19 = arith.constant 0 : index
      %23 = vector.load %arg7[%c0_18, %c0_19] : memref<8x128xf32, #tpu.memory_space<vmem>>, vector<8x128xf32>
      tpu.vector_store %arg7[%c0_18, %c0_19], %22 {strides = array<i32>} : memref<8x128xf32, #tpu.memory_space<vmem>>, vector<8x128xf32>,
      %cst_20 = arith.constant 0.000000e+00 : f32
      %24 = vector.broadcast %cst_20 : f32 to vector<8x128xf32>
      %c0_21 = arith.constant 0 : index
      %c0_22 = arith.constant 0 : index
      %25 = vector.load %arg8[%c0_21, %c0_22] : memref<8x128xf32, #tpu.memory_space<vmem>>, vector<8x128xf32>
      tpu.vector_store %arg8[%c0_21, %c0_22], %24 {strides = array<i32>} : memref<8x128xf32, #tpu.memory_space<vmem>>, vector<8x128xf32>,
    } else {
    }
    %c0 = arith.constant 0 : index
    %c0_1 = arith.constant 0 : index
    %c0_2 = arith.constant 0 : index
    %3 = vector.load %arg3[%c0, %c0_1, %c0_2] : memref<1x8x128xf32, #tpu.memory_space<vmem>>, vector<1x8x128xf32>
    %4 = vector.shape_cast %3 : vector<1x8x128xf32> to vector<8x128xf32>
    %c0_3 = arith.constant 0 : index
    %c0_4 = arith.constant 0 : index
    %c0_5 = arith.constant 0 : index
    %5 = vector.load %arg4[%c0_3, %c0_4, %c0_5] : memref<1x8x128xf32, #tpu.memory_space<vmem>>, vector<1x8x128xf32>
    %6 = vector.shape_cast %5 : vector<1x8x128xf32> to vector<8x128xf32>
    %c0_6 = arith.constant 0 : index
    %c0_7 = arith.constant 0 : index
    %7 = vector.load %arg7[%c0_6, %c0_7] : memref<8x128xf32, #tpu.memory_space<vmem>>, vector<8x128xf32>
    %8 = arith.mulf %4, %6 : vector<8x128xf32>
    %9 = vector.shape_cast %8 : vector<8x128xf32> to vector<1x8x128xf32>
    %cst = arith.constant dense<0.000000e+00> : vector<8x128xf32>
    %10 = vector.multi_reduction <add>, %9, %cst [0] : vector<1x8x128xf32> to vector<8x128xf32>
    %11 = arith.addf %7, %10 : vector<8x128xf32>
    %c0_8 = arith.constant 0 : index
    %c0_9 = arith.constant 0 : index
    %12 = vector.load %arg7[%c0_8, %c0_9] : memref<8x128xf32, #tpu.memory_space<vmem>>, vector<8x128xf32>
    tpu.vector_store %arg7[%c0_8, %c0_9], %11 {strides = array<i32>} : memref<8x128xf32, #tpu.memory_space<vmem>>, vector<8x128xf32>,
    %c0_10 = arith.constant 0 : index
    %c0_11 = arith.constant 0 : index
    %13 = vector.load %arg8[%c0_10, %c0_11] : memref<8x128xf32, #tpu.memory_space<vmem>>, vector<8x128xf32>
    %14 = arith.addf %4, %6 : vector<8x128xf32>
    %15 = vector.shape_cast %14 : vector<8x128xf32> to vector<1x8x128xf32>
    %cst_12 = arith.constant dense<0.000000e+00> : vector<8x128xf32>
    %16 = vector.multi_reduction <add>, %15, %cst_12 [0] : vector<1x8x128xf32> to vector<8x128xf32>
    %17 = arith.addf %13, %16 : vector<8x128xf32>
    %c0_13 = arith.constant 0 : index
    %c0_14 = arith.constant 0 : index
    %18 = vector.load %arg8[%c0_13, %c0_14] : memref<8x128xf32, #tpu.memory_space<vmem>>, vector<8x128xf32>
    tpu.vector_store %arg8[%c0_13, %c0_14], %17 {strides = array<i32>} : memref<8x128xf32, #tpu.memory_space<vmem>>, vector<8x128xf32>,
    %c0_i32_15 = arith.constant 0 : i32
    %19 = arith.cmpi eq, %arg2, %c0_i32_15 : i32
    %20 = arith.extui %19 : i1 to i32
    %c0_i32_16 = arith.constant 0 : i32
    %21 = arith.cmpi ne, %20, %c0_i32_16 : i32
    scf.if %21 {
      %c0_17 = arith.constant 0 : index
      %c0_18 = arith.constant 0 : index
      %22 = vector.load %arg7[%c0_17, %c0_18] : memref<8x128xf32, #tpu.memory_space<vmem>>, vector<8x128xf32>
      %c0_19 = arith.constant 0 : index
      %c0_20 = arith.constant 0 : index
      %c0_21 = arith.constant 0 : index
      %c0_22 = arith.constant 0 : index
      %23 = vector.load %arg5[%c0_19, %c0_20, %c0_21, %c0_22] : memref<1x1x8x128xf32, #tpu.memory_space<vmem>>, vector<1x1x8x128xf32>
      %24 = vector.shape_cast %23 : vector<1x1x8x128xf32> to vector<8x128xf32>
      %25 = vector.shape_cast %22 : vector<8x128xf32> to vector<1x1x8x128xf32>
      tpu.vector_store %arg5[%c0_19, %c0_20, %c0_21, %c0_22], %25 {strides = array<i32>} : memref<1x1x8x128xf32, #tpu.memory_space<vmem>>, vector<1x1x8x128xf32>,
      %c0_23 = arith.constant 0 : index
      %c0_24 = arith.constant 0 : index
      %26 = vector.load %arg8[%c0_23, %c0_24] : memref<8x128xf32, #tpu.memory_space<vmem>>, vector<8x128xf32>
      %c0_25 = arith.constant 0 : index
      %c0_26 = arith.constant 0 : index
      %c0_27 = arith.constant 0 : index
      %c0_28 = arith.constant 0 : index
      %27 = vector.load %arg6[%c0_25, %c0_26, %c0_27, %c0_28] : memref<1x1x8x128xf32, #tpu.memory_space<vmem>>, vector<1x1x8x128xf32>
      %28 = vector.shape_cast %27 : vector<1x1x8x128xf32> to vector<8x128xf32>
      %29 = vector.shape_cast %26 : vector<8x128xf32> to vector<1x1x8x128xf32>
      tpu.vector_store %arg6[%c0_25, %c0_26, %c0_27, %c0_28], %29 {strides = array<i32>} : memref<1x1x8x128xf32, #tpu.memory_space<vmem>>, vector<1x1x8x128xf32>,
    } else {
    }
    return
  }
  func.func @transform_0(%arg0: i32, %arg1: i32, %arg2: i32) -> (i32, i32, i32) {
    %c1_i32 = arith.constant 1 : i32
    %0 = arith.muli %arg1, %c1_i32 : i32
    %1 = arith.addi %0, %arg2 : i32
    %c0_i32 = arith.constant 0 : i32
    %c0_i32_0 = arith.constant 0 : i32
    return %arg0, %1, %c0_i32 : i32, i32, i32
  }
  func.func @transform_1(%arg0: i32, %arg1: i32, %arg2: i32) -> (i32, i32, i32) {
    %c1_i32 = arith.constant 1 : i32
    %0 = arith.muli %arg1, %c1_i32 : i32
    %1 = arith.addi %0, %arg2 : i32
    %c0_i32 = arith.constant 0 : i32
    %c0_i32_0 = arith.constant 0 : i32
    return %arg0, %1, %c0_i32 : i32, i32, i32
  }
  func.func @transform_2(%arg0: i32, %arg1: i32, %arg2: i32) -> (i32, i32, i32, i32) {
    %c0_i32 = arith.constant 0 : i32
    %c0_i32_0 = arith.constant 0 : i32
    %c0_i32_1 = arith.constant 0 : i32
    return %arg0, %arg1, %c0_i32, %c0_i32_0 : i32, i32, i32, i32
  }
  func.func @transform_3(%arg0: i32, %arg1: i32, %arg2: i32) -> (i32, i32, i32, i32) {
    %c0_i32 = arith.constant 0 : i32
    %c0_i32_0 = arith.constant 0 : i32
    %c0_i32_1 = arith.constant 0 : i32
    return %arg0, %arg1, %c0_i32, %c0_i32_0 : i32, i32, i32, i32
  }
}

</mosaic_0001>

<llo_original>
// kernel: tpu_custom_call.1
$region0: #{tpu_custom_call.1}
  #allocation0 [shape = 'u32[]', space=smem, size = 0x4, offset = 0x4, fixed_abs, tag = 'smem constant byte address 0x4 - core index']
  #allocation1 [shape = 'u32[144,128]{1,0:T(1,128)}', space=vmem, size = 0x12000, scoped, tag = 'internal scratch']
  #allocation2 [shape = 'f32[8,128]{1,0:T(8,128)}', space=vmem, size = 0x1000, scoped, tag = 'scratch operand']
  #allocation3 [shape = 'f32[8,128]{1,0:T(8,128)}', space=vmem, size = 0x1000, scoped, tag = 'scratch operand']
  %s0 = inlined_call_operand.hbm [shape: f32[2,8,128], index: 0, kind: input, shape index: {}]
  %s1 = inlined_call_operand.hbm [shape: f32[2,8,128], index: 1, kind: input, shape index: {}]
  %s2 = inlined_call_operand.hbm [shape: f32[2,1,8,128], index: 2, kind: output, shape index: {0}]
  %s3 = inlined_call_operand.hbm [shape: f32[2,1,8,128], index: 3, kind: output, shape index: {1}]
  %4 = xla_tuple %s2, %s3
  %s5 = sld [smem:[#allocation0]]
  $region65: #{tpu_custom_call.1} parent=0
    _
  %s7 = ssub.s32 1, %s5
  %s8 = scalar_select 0, %s7, %s5
  $region1: #{tpu_custom_call.1} parent=0
    #allocation4 [shape = 'u8[8192]{0}', space=vmem, size = 0x2000, scoped, tag = 'input window, operand 0']
    #allocation5 [shape = 's32[2]{0}', space=sflag, size = 0x8, scoped, tag = 'scoped memory for tpu_custom_call.1']
    #allocation6 [shape = 's32[2]{0}', space=sflag, size = 0x8, scoped, tag = 'scoped memory for tpu_custom_call.1']
    #allocation7 [shape = 'u8[8192]{0}', space=vmem, size = 0x2000, scoped, tag = 'input window, operand 1']
    #allocation8 [shape = 's32[2]{0}', space=sflag, size = 0x8, scoped, tag = 'scoped memory for tpu_custom_call.1']
    #allocation9 [shape = 'u8[8192]{0}', space=vmem, size = 0x2000, scoped, tag = 'output window, operand 0']
    #allocation10 [shape = 'u8[8192]{0}', space=vmem, size = 0x2000, scoped, tag = 'output window, operand 1']
    #allocation11 [shape = 's32[2]{0}', space=sflag, size = 0x8, scoped, tag = 'scoped memory for tpu_custom_call.1']
    %9 = vsyncpa [#allocation5], 0
    %s10 = scalar_lea.sflag [#allocation5], 1
    %11 = vsyncpa %s10, 0
    %12 = vsyncpa [#allocation8], 0
    %s13 = scalar_lea.sflag [#allocation8], 1
    %14 = vsyncpa %s13, 0
    %15 = vsyncpa [#allocation6], 0
    %s16 = scalar_lea.sflag [#allocation6], 1
    %17 = vsyncpa %s16, 0
    %18 = vsyncpa [#allocation11], 0
    %s19 = scalar_lea.sflag [#allocation11], 1
    %20 = vsyncpa %s19, 0
    loop: start=0, step=1, limit=4
    $region2: #{tpu_custom_call.1} parent=1 // loop_pre_header
      _
    $region3: #{tpu_custom_call.1} parent=1 // loop_header
      %s22 = sphi 0, %s26
      %p23 = scmp.ge.s32.totalorder %s22, 4
      %s29 = sphi 0, %s48
      %s30 = sphi 0, %s44
      %s31 = sphi 0, %s40
      %s32 = sphi 0, %s29
      %s33 = sphi 0, %s30
      %s34 = sphi 0, %s31
      %s35 = sphi 0, %s32
      %s36 = sphi 0, %s33
      %s37 = sphi 0, %s34
      %s55 = sphi 0, %s57
      %s58 = sphi 0, %s55
      %s59 = sphi 0, %s58
      %s75 = sphi 0, %s59
      %s85 = sphi 0, %s87
      %s88 = sphi 0, %s85
      %s89 = sphi 0, %s88
      %s105 = sphi 0, %s89
      %s113 = sphi 0, %s115
      %s116 = sphi 0, %s113
      %s117 = sphi 0, %s116
      %s133 = sphi 0, %s117
      %s141 = sphi 0, %s143
      %s144 = sphi 0, %s141
      %s145 = sphi 0, %s144
      %s161 = sphi 0, %s145
    $region4: #{tpu_custom_call.1} parent=1 // loop_header_branch
      %25 = sbr.rel (%p23) target = $region8
    $region5: #{tpu_custom_call.1} parent=1 // loop_body
      %s27 = ssub.s32 %s22, 1
      %s28 = ssub.s32 %s22, 2
      %s38 = sadd.s32 1, %s31
      %p39 = scmp.ge.s32.totalorder %s38, 1
      %s40 = scalar_select %p39, 0, %s38
      %s41 = sadd.s32 1, %s30
      %s42 = scalar_select %p39, %s41, %s30
      %p43 = scmp.ge.s32.totalorder %s42, 1
      %s44 = scalar_select %p43, 0, %s42
      %s45 = sadd.s32 1, %s29
      %s46 = scalar_select %p43, %s45, %s29
      %p47 = scmp.ge.s32.totalorder %s46, 2
      %s48 = scalar_select %p47, 0, %s46
      %s49 = sadd.s32 %s30, %s31
      %s50 = sadd.s32 %s44, %s40
      %s51 = ssub.s32 %s29, %s48
      %s52 = ssub.s32 %s49, %s50
      %s53 = sor.u32 %s51, %s52
      %p54 = scmp.eq.s32.totalorder %s53, 0
      %s56 = sadd.s32 %s55, 1
      %s57 = scalar_select %p54, %s55, %s56
      %p60 = pneg %p54
      %p61 = scmp.eq.s32.totalorder %s22, 1
      %p62 = por %p60, %p61
      %p63 = scmp.ne.s32.totalorder %s55, %s58
      %p64 = scmp.eq.s32.totalorder %s22, 0
      %p65 = por %p63, %p64
      %p66 = scmp.ne.s32.totalorder %s55, %s58
      %p67 = scmp.eq.s32.totalorder %s27, 1
      %p68 = por %p66, %p67
      %p69 = scmp.ne.s32.totalorder %s58, %s59
      %p70 = scmp.eq.s32.totalorder %s27, 0
      %p71 = por %p69, %p70
      %p72 = scmp.ne.s32.totalorder %s58, %s59
      %p73 = scmp.eq.s32.totalorder %s28, 1
      %p74 = por %p72, %p73
      %p76 = scmp.ne.s32.totalorder %s59, %s75
      %p77 = scmp.eq.s32.totalorder %s28, 0
      %p78 = por %p76, %p77
      %s79 = sadd.s32 %s30, %s31
      %s80 = sadd.s32 %s44, %s40
      %s81 = ssub.s32 %s29, %s48
      %s82 = ssub.s32 %s79, %s80
      %s83 = sor.u32 %s81, %s82
      %p84 = scmp.eq.s32.totalorder %s83, 0
      %s86 = sadd.s32 %s85, 1
      %s87 = scalar_select %p84, %s85, %s86
      %p90 = pneg %p84
      %p91 = scmp.eq.s32.totalorder %s22, 1
      %p92 = por %p90, %p91
      %p93 = scmp.ne.s32.totalorder %s85, %s88
      %p94 = scmp.eq.s32.totalorder %s22, 0
      %p95 = por %p93, %p94
      %p96 = scmp.ne.s32.totalorder %s85, %s88
      %p97 = scmp.eq.s32.totalorder %s27, 1
      %p98 = por %p96, %p97
      %p99 = scmp.ne.s32.totalorder %s88, %s89
      %p100 = scmp.eq.s32.totalorder %s27, 0
      %p101 = por %p99, %p100
      %p102 = scmp.ne.s32.totalorder %s88, %s89
      %p103 = scmp.eq.s32.totalorder %s28, 1
      %p104 = por %p102, %p103
      %p106 = scmp.ne.s32.totalorder %s89, %s105
      %p107 = scmp.eq.s32.totalorder %s28, 0
      %p108 = por %p106, %p107
      %s109 = ssub.s32 %s29, %s48
      %s110 = ssub.s32 %s30, %s44
      %s111 = sor.u32 %s109, %s110
      %p112 = scmp.eq.s32.totalorder %s111, 0
      %s114 = sadd.s32 %s113, 1
      %s115 = scalar_select %p112, %s113, %s114
      %p118 = pneg %p112
      %p119 = scmp.eq.s32.totalorder %s22, 1
      %p120 = por %p118, %p119
      %p121 = scmp.ne.s32.totalorder %s113, %s116
      %p122 = scmp.eq.s32.totalorder %s22, 0
      %p123 = por %p121, %p122
      %p124 = scmp.ne.s32.totalorder %s113, %s116
      %p125 = scmp.eq.s32.totalorder %s27, 1
      %p126 = por %p124, %p125
      %p127 = scmp.ne.s32.totalorder %s116, %s117
      %p128 = scmp.eq.s32.totalorder %s27, 0
      %p129 = por %p127, %p128
      %p130 = scmp.ne.s32.totalorder %s116, %s117
      %p131 = scmp.eq.s32.totalorder %s28, 1
      %p132 = por %p130, %p131
      %p134 = scmp.ne.s32.totalorder %s117, %s133
      %p135 = scmp.eq.s32.totalorder %s28, 0
      %p136 = por %p134, %p135
      %s137 = ssub.s32 %s29, %s48
      %s138 = ssub.s32 %s30, %s44
      %s139 = sor.u32 %s137, %s138
      %p140 = scmp.eq.s32.totalorder %s139, 0
      %s142 = sadd.s32 %s141, 1
      %s143 = scalar_select %p140, %s141, %s142
      %p146 = pneg %p140
      %p147 = scmp.eq.s32.totalorder %s22, 1
      %p148 = por %p146, %p147
      %p149 = scmp.ne.s32.totalorder %s141, %s144
      %p150 = scmp.eq.s32.totalorder %s22, 0
      %p151 = por %p149, %p150
      %p152 = scmp.ne.s32.totalorder %s141, %s144
      %p153 = scmp.eq.s32.totalorder %s27, 1
      %p154 = por %p152, %p153
      %p155 = scmp.ne.s32.totalorder %s144, %s145
      %p156 = scmp.eq.s32.totalorder %s27, 0
      %p157 = por %p155, %p156
      %p158 = scmp.ne.s32.totalorder %s144, %s145
      %p159 = scmp.eq.s32.totalorder %s28, 1
      %p160 = por %p158, %p159
      %p162 = scmp.ne.s32.totalorder %s145, %s161
      %p163 = scmp.eq.s32.totalorder %s28, 0
      %p164 = por %p162, %p163
      %p165 = scmp.le.s32.totalorder 1, %s22
      %p166 = scmp.lt.s32.totalorder %s22, 3
      %p167 = pnand %p165, %p166
      %p168 = pneg %p167
      // Predicated region
      $region9: #{tpu_custom_call.1} parent=5 // pred_check
        _
      $region10: #{tpu_custom_call.1} parent=5 // pred_check_branch
        %170 = sbr.rel (%p167) target = $region12
      $region11: #{tpu_custom_call.1} parent=5 // pred_region
        %s171 = ssub.s32 %s22, 1
      $region12: #{tpu_custom_call.1} parent=5 // pred_fallthru
        _
      %p172 = scmp.lt.s32.totalorder %s22, 2
      // Predicated region
      $region13: #{tpu_custom_call.1} parent=5 // pred_check
        %p173 = pneg %p172
      $region14: #{tpu_custom_call.1} parent=5 // pred_check_branch
        %175 = sbr.rel (%p173) target = $region16
      $region15: #{tpu_custom_call.1} parent=5 // pred_region
        // Predicated region
        $region17: #{tpu_custom_call.1} parent=15 // pred_check
          %p176 = pneg %p65
        $region18: #{tpu_custom_call.1} parent=15 // pred_check_branch
          %178 = sbr.rel (%p176) target = $region20
        $region19: #{tpu_custom_call.1} parent=15 // pred_region
          %s179 = sand.u32 %s55, 1
          %s180 = scalar_lea.sflag [#allocation5], %s179
          %s181 = sand.u32 %s55, 1
          %s182 = smul.addr %s181, 8
          %s183 = scalar_lea.vmem [#allocation4], %s182
          %s184 = sadd.s32 %s30, %s31
          %s186 = ssub.s32 128, 128
          %187 = vsyncadd %s180, %s186
          %s188 = sadd.s32 %s184, %s29
          %s189 = smul.addr %s188, 128
          %s190 = scalar_lea.hbm %s0, %s189
          %s192 = sshll.u32 %s183, 4
          %s193 = int_to_ptr.vmem [resolvable:$true] %s192
          %195 = dma.hbm_to_vmem [thread:$0]  %s190, 128, %s193, %s180
        $region20: #{tpu_custom_call.1} parent=15 // pred_fallthru
          _
        // Predicated region
        $region21: #{tpu_custom_call.1} parent=15 // pred_check
          %p196 = pneg %p95
        $region22: #{tpu_custom_call.1} parent=15 // pred_check_branch
          %198 = sbr.rel (%p196) target = $region24
        $region23: #{tpu_custom_call.1} parent=15 // pred_region
          %s199 = sand.u32 %s85, 1
          %s200 = scalar_lea.sflag [#allocation8], %s199
          %s201 = sand.u32 %s85, 1
          %s202 = smul.addr %s201, 8
          %s203 = scalar_lea.vmem [#allocation7], %s202
          %s204 = sadd.s32 %s30, %s31
          %s206 = ssub.s32 128, 128
          %207 = vsyncadd %s200, %s206
          %s208 = sadd.s32 %s204, %s29
          %s209 = smul.addr %s208, 128
          %s210 = scalar_lea.hbm %s1, %s209
          %s212 = sshll.u32 %s203, 4
          %s213 = int_to_ptr.vmem [resolvable:$true] %s212
          %215 = dma.hbm_to_vmem [thread:$0]  %s210, 128, %s213, %s200
        $region24: #{tpu_custom_call.1} parent=15 // pred_fallthru
          _
      $region16: #{tpu_custom_call.1} parent=5 // pred_fallthru
        _
      %p216 = scmp.le.s32.totalorder 1, %s22
      %p217 = scmp.lt.s32.totalorder %s22, 3
      %p218 = pnand %p216, %p217
      %p219 = pneg %p218
      // Predicated region
      $region25: #{tpu_custom_call.1} parent=5 // pred_check
        _
      $region26: #{tpu_custom_call.1} parent=5 // pred_check_branch
        %221 = sbr.rel (%p218) target = $region28
      $region27: #{tpu_custom_call.1} parent=5 // pred_region
        %s222 = ssub.s32 %s22, 1
        %s223 = sand.u32 %s58, 1
        %s224 = scalar_lea.sflag [#allocation5], %s223
        %s225 = sand.u32 %s58, 1
        %s226 = smul.addr %s225, 8
        %s227 = scalar_lea.vmem [#allocation4], %s226
        // Predicated region
        $region29: #{tpu_custom_call.1} parent=27 // pred_check
          %p228 = pneg %p71
        $region30: #{tpu_custom_call.1} parent=27 // pred_check_branch
          %230 = sbr.rel (%p228) target = $region32
        $region31: #{tpu_custom_call.1} parent=27 // pred_region
          %231 = dma.done %s224, 128
        $region32: #{tpu_custom_call.1} parent=27 // pred_fallthru
          _
        %s232 = sand.u32 %s88, 1
        %s233 = scalar_lea.sflag [#allocation8], %s232
        %s234 = sand.u32 %s88, 1
        %s235 = smul.addr %s234, 8
        %s236 = scalar_lea.vmem [#allocation7], %s235
        // Predicated region
        $region33: #{tpu_custom_call.1} parent=27 // pred_check
          %p237 = pneg %p101
        $region34: #{tpu_custom_call.1} parent=27 // pred_check_branch
          %239 = sbr.rel (%p237) target = $region36
        $region35: #{tpu_custom_call.1} parent=27 // pred_region
          %240 = dma.done %s233, 128
        $region36: #{tpu_custom_call.1} parent=27 // pred_fallthru
          _
        %s241 = sand.u32 %s58, 1
        %s242 = scalar_lea.sflag [#allocation5], %s241
        %s243 = sand.u32 %s58, 1
        %s244 = smul.addr %s243, 8
        %s245 = scalar_lea.vmem [#allocation4], %s244
        %p246 = pneg %p71
        %p247 = pneg %p68
        %s248 = sand.u32 %s88, 1
        %s249 = scalar_lea.sflag [#allocation8], %s248
        %s250 = sand.u32 %s88, 1
        %s251 = smul.addr %s250, 8
        %s252 = scalar_lea.vmem [#allocation7], %s251
        %p253 = pneg %p101
        %p254 = pneg %p98
        %p255 = pneg %p129
        %p256 = pneg %p126
        %s257 = sand.u32 %s116, 1
        %s258 = scalar_lea.sflag [#allocation6], %s257
        %s259 = sand.u32 %s116, 1
        %s260 = smul.addr %s259, 8
        %s261 = scalar_lea.vmem [#allocation9], %s260
        %p262 = pneg %p157
        %p263 = pneg %p154
        %s264 = sand.u32 %s144, 1
        %s265 = scalar_lea.sflag [#allocation11], %s264
        %s266 = sand.u32 %s144, 1
        %s267 = smul.addr %s266, 8
        %s268 = scalar_lea.vmem [#allocation10], %s267
        %s269 = sadd.s32 %s33, %s34
        %s270 = sadd.s32 %s33, %s34
        %p271 = scmp.eq.s32.totalorder %s34, 0
        // Predicated region
        $region37: #{tpu_custom_call.1} parent=27 // pred_check
          %p272 = pneg %p271
        $region38: #{tpu_custom_call.1} parent=27 // pred_check_branch
          %274 = sbr.rel (%p272) target = $region40
        $region39: #{tpu_custom_call.1} parent=27 // pred_region
          %275 = vst [vmem:[#allocation2] sm:$0xff] 0.0
          %276 = vst [vmem:[#allocation3] sm:$0xff] 0.0
        $region40: #{tpu_custom_call.1} parent=27 // pred_fallthru
          _
        %v277 = vld [vmem:[%s227] sm:$0xff]
        %v278 = vld [vmem:[%s236] sm:$0xff]
        %v279 = vld [vmem:[#allocation2] sm:$0xff]
        %v280 = vmul.f32 %v277, %v278
        %v281 = vadd.f32 %v280, 0.0
        %v282 = vadd.f32 %v279, %v281
        %283 = vst [vmem:[#allocation2] sm:$0xff] %v282
        %v284 = vld [vmem:[#allocation3] sm:$0xff]
        %v285 = vadd.f32 %v277, %v278
        %v286 = vadd.f32 %v285, 0.0
        %v287 = vadd.f32 %v284, %v286
        %288 = vst [vmem:[#allocation3] sm:$0xff] %v287
        // Predicated region
        $region41: #{tpu_custom_call.1} parent=27 // pred_check
          %p289 = pneg %p271
        $region42: #{tpu_custom_call.1} parent=27 // pred_check_branch
          %291 = sbr.rel (%p289) target = $region44
        $region43: #{tpu_custom_call.1} parent=27 // pred_region
          %v292 = vld [vmem:[#allocation2] sm:$0xff]
          %293 = vst [vmem:[%s261] sm:$0xff] %v292
          %v294 = vld [vmem:[#allocation3] sm:$0xff]
          %295 = vst [vmem:[%s268] sm:$0xff] %v294
        $region44: #{tpu_custom_call.1} parent=27 // pred_fallthru
          _
        %s296 = sand.u32 %s116, 1
        %s297 = scalar_lea.sflag [#allocation6], %s296
        %s298 = sand.u32 %s116, 1
        %s299 = smul.addr %s298, 8
        %s300 = scalar_lea.vmem [#allocation9], %s299
        %s301 = sand.u32 %s144, 1
        %s302 = scalar_lea.sflag [#allocation11], %s301
        %s303 = sand.u32 %s144, 1
        %s304 = smul.addr %s303, 8
        %s305 = scalar_lea.vmem [#allocation10], %s304
        // Predicated region
        $region45: #{tpu_custom_call.1} parent=27 // pred_check
          %p306 = pneg %p126
        $region46: #{tpu_custom_call.1} parent=27 // pred_check_branch
          %308 = sbr.rel (%p306) target = $region48
        $region47: #{tpu_custom_call.1} parent=27 // pred_region
          %s310 = ssub.s32 128, 128
          %311 = vsyncadd %s297, %s310
          %s312 = sadd.s32 %s33, %s32
          %s313 = smul.addr %s312, 128
          %s314 = scalar_lea.hbm %s2, %s313
          %s316 = sshll.u32 %s300, 4
          %s317 = int_to_ptr.vmem [resolvable:$true] %s316
          %319 = dma.vmem_to_hbm [thread:$0]  %s317, 128, %s314, %s297
        $region48: #{tpu_custom_call.1} parent=27 // pred_fallthru
          _
        // Predicated region
        $region49: #{tpu_custom_call.1} parent=27 // pred_check
          %p320 = pneg %p154
        $region50: #{tpu_custom_call.1} parent=27 // pred_check_branch
          %322 = sbr.rel (%p320) target = $region52
        $region51: #{tpu_custom_call.1} parent=27 // pred_region
          %s324 = ssub.s32 128, 128
          %325 = vsyncadd %s302, %s324
          %s326 = sadd.s32 %s33, %s32
          %s327 = smul.addr %s326, 128
          %s328 = scalar_lea.hbm %s3, %s327
          %s330 = sshll.u32 %s305, 4
          %s331 = int_to_ptr.vmem [resolvable:$true] %s330
          %333 = dma.vmem_to_hbm [thread:$0]  %s331, 128, %s328, %s302
        $region52: #{tpu_custom_call.1} parent=27 // pred_fallthru
          _
      $region28: #{tpu_custom_call.1} parent=5 // pred_fallthru
        _
      %p334 = scmp.le.s32.totalorder 2, %s22
      // Predicated region
      $region53: #{tpu_custom_call.1} parent=5 // pred_check
        %p335 = pneg %p334
      $region54: #{tpu_custom_call.1} parent=5 // pred_check_branch
        %337 = sbr.rel (%p335) target = $region56
      $region55: #{tpu_custom_call.1} parent=5 // pred_region
        %s338 = ssub.s32 %s22, 2
        // Predicated region
        $region57: #{tpu_custom_call.1} parent=55 // pred_check
          %p339 = pneg %p132
        $region58: #{tpu_custom_call.1} parent=55 // pred_check_branch
          %341 = sbr.rel (%p339) target = $region60
        $region59: #{tpu_custom_call.1} parent=55 // pred_region
          %s342 = sand.u32 %s117, 1
          %s343 = scalar_lea.sflag [#allocation6], %s342
          %s344 = sand.u32 %s117, 1
          %s345 = smul.addr %s344, 8
          %s346 = scalar_lea.vmem [#allocation9], %s345
          %347 = dma.done %s343, 128
        $region60: #{tpu_custom_call.1} parent=55 // pred_fallthru
          _
        // Predicated region
        $region61: #{tpu_custom_call.1} parent=55 // pred_check
          %p348 = pneg %p160
        $region62: #{tpu_custom_call.1} parent=55 // pred_check_branch
          %350 = sbr.rel (%p348) target = $region64
        $region63: #{tpu_custom_call.1} parent=55 // pred_region
          %s351 = sand.u32 %s145, 1
          %s352 = scalar_lea.sflag [#allocation11], %s351
          %s353 = sand.u32 %s145, 1
          %s354 = smul.addr %s353, 8
          %s355 = scalar_lea.vmem [#allocation10], %s354
          %356 = dma.done %s352, 128
        $region64: #{tpu_custom_call.1} parent=55 // pred_fallthru
          _
      $region56: #{tpu_custom_call.1} parent=5 // pred_fallthru
        _
    $region6: #{tpu_custom_call.1} parent=1 // loop_footer
      %s26 = sadd.s32 1, %s22
    $region7: #{tpu_custom_call.1} parent=1 // loop_footer_branch
      %21 = sbr.rel target = $region3
    $region8: #{tpu_custom_call.1} parent=1 // loop_exit
      _
    %357 = vsyncpa [#allocation5], 1
    %s358 = scalar_lea.sflag [#allocation5], 1
    %359 = vsyncpa %s358, 1
    %360 = vsyncpa [#allocation8], 1
    %s361 = scalar_lea.sflag [#allocation8], 1
    %362 = vsyncpa %s361, 1
    %363 = vsyncpa [#allocation6], 1
    %s364 = scalar_lea.sflag [#allocation6], 1
    %365 = vsyncpa %s364, 1
    %366 = vsyncpa [#allocation11], 1
    %s367 = scalar_lea.sflag [#allocation11], 1
    %368 = vsyncpa %s367, 1

</llo_original>
